<compile_context>
chip_gen: v5e
topology: v5e:2x2
jax: 0.10.0
libtpu: 0.0.40
codegen_flags: <defaults>
</compile_context>

<pallas_src>
import jax
import jax.numpy as jnp
from jax.experimental import pallas as pl
from jax.experimental.pallas import tpu as pltpu


def _round_up(x, m):
    return (x + m - 1) // m * m


# ----------------------------------------------------------------------------
# Kernel 1: rgb_to_grayscale (kornia weights 0.299 / 0.587 / 0.114)
# Lane-dense (3, N) layout so stores are unmasked full-lane vst.
# ----------------------------------------------------------------------------
def _rgb_to_grayscale_kernel(x_ref, o_ref):
    x = x_ref[...]                                     # (3, Npad)
    o_ref[...] = (0.299 * x[0:1, :] + 0.587 * x[1:2, :]
                  + 0.114 * x[2:3, :]).astype(o_ref.dtype)


def rgb_to_grayscale(img):
    b, c, h, w = img.shape
    assert c == 3
    n = b * h * w
    n_pad = _round_up(n, 128)
    x = jnp.transpose(img.astype(jnp.float32), (1, 0, 2, 3)).reshape(3, n)
    x = jnp.pad(x, ((0, 0), (0, n_pad - n)))
    g = pl.pallas_call(
        _rgb_to_grayscale_kernel,
        out_shape=jax.ShapeDtypeStruct((1, n_pad), jnp.float32),
        in_specs=[pl.BlockSpec(memory_space=pltpu.MemorySpace.VMEM)],
        out_specs=pl.BlockSpec(memory_space=pltpu.MemorySpace.VMEM),
    )(x)
    return g[:, :n].reshape(1, b, h, w).transpose(1, 0, 2, 3).astype(img.dtype)


# ----------------------------------------------------------------------------
# Kernel 2: fused warp_perspective (separable bilinear) + blend + mask union
# ----------------------------------------------------------------------------
def _make_stitch_kernel(H, Hp, Wr, Wrp, Wo, no_tile):
    def kernel(hinv_ref, right_ref, dstimg_ref, dstmask_ref, out_ref, maskout_ref):
        f32 = jnp.float32
        h = [hinv_ref[i] for i in range(9)]  # H^{-1}, row-major, from SMEM

        # Flattened canvas pixel ids covered by this grid step: p = y*Wo + x.
        p = (pl.program_id(0) * no_tile
             + jax.lax.broadcasted_iota(jnp.int32, (1, no_tile), 1))
        xo = (p % Wo).astype(f32)
        yo = (p // Wo).astype(f32)

        # Inverse-warp canvas coords into right-image pixel coords.
        xs = h[0] * xo + h[1] * yo + h[2]
        ys = h[3] * xo + h[4] * yo + h[5]
        zs = h[6] * xo + h[7] * yo + h[8]
        # kornia convert_points_from_homogeneous: scale = 1/z if |z| > eps else 1
        # (sign-preserving; no sign flip for small negative z).
        zs = jnp.where(jnp.abs(zs) > 1e-8, zs, jnp.ones_like(zs))
        inv_z = pl.reciprocal(zs, approx=True)   # EUP slot, frees VALU bandwidth
        xs = xs * inv_z                          # (1, no_tile)
        ys = ys * inv_z

        # Separable bilinear weights (zeros padding, align_corners=True).
        gx = jax.lax.broadcasted_iota(jnp.int32, (Wrp, no_tile), 0).astype(f32)
        tx = jnp.maximum(0.0, 1.0 - jnp.abs(xs - gx))            # (Wrp, no_tile)
        gy = jax.lax.broadcasted_iota(jnp.int32, (Hp, no_tile), 0).astype(f32)
        ty = jnp.maximum(0.0, 1.0 - jnp.abs(ys - gy))            # (Hp, no_tile)

        # x-contraction on the MXU (bf16 operands, f32 accumulation):
        #   (BCp*Hp, Wrp) @ (Wrp, no_tile) -> (BCp*Hp, no_tile)
        t = jnp.dot(right_ref[...], tx.astype(jnp.bfloat16),
                    preferred_element_type=jnp.float32)
        # y-contraction: per-pixel weighted reduce over the Hp source rows
        # (ty depends on the output pixel, so this is a VPU reduce, not a matmul).
        bcp = right_ref.shape[0] // Hp
        t3 = t.reshape(bcp, Hp, no_tile)
        src_img = jnp.sum(t3 * ty[None, :, :], axis=1)           # (BCp, no_tile)

        # Nearest-neighbour warp of the all-ones right mask == in-bounds test
        # (round-half-to-even, matching grid_sample 'nearest' semantics).
        rx = jnp.round(xs)
        ry = jnp.round(ys)
        valid = ((rx >= 0.0) & (rx <= Wr - 1.0)
                 & (ry >= 0.0) & (ry <= H - 1.0))                # (1, no_tile)
        src_mask = valid.astype(f32)

        # Naive blending: where(src_mask == 1, src_img, dst_img).
        out_ref[...] = jnp.where(valid, src_img,
                                 dstimg_ref[...]).astype(out_ref.dtype)
        # (dst_mask + src_mask).bool().to(dtype)
        maskout_ref[...] = ((dstmask_ref[...] + src_mask) != 0.0
                            ).astype(maskout_ref.dtype)

    return kernel


def stitch_pair(images_left, images_right, homo, mask_left=None, mask_right=None,
                *, no_tile=512):
    """Pallas equivalent of ImageStitcher.stitch_pair (homography given)."""
    B, C, H, Wl = images_left.shape
    Wr = images_right.shape[-1]
    assert images_right.shape[:3] == (B, C, H)
    Wo = Wl + Wr
    No = H * Wo

    if mask_left is None:
        mask_left = jnp.ones_like(images_left)
    if mask_right is not None:
        # TODO(synk): a general (non-all-ones) right mask would need the dense
        # nearest-neighbour sampling matmul; ImageStitcher.forward never uses it.
        raise NotImplementedError("Only mask_right=None (all-ones) is supported.")

    BC = B * C
    BCp = _round_up(BC, 8)          # sublane padding for outputs / matmul M-dim
    Hp = _round_up(H, 8)            # keeps the in-kernel reshape sublane-aligned
    Wrp = _round_up(Wr, 128)        # lane-dense contraction dimension
    no_tile = min(no_tile, _round_up(No, 128))
    Nop = _round_up(No, no_tile)
    num_tiles = Nop // no_tile

    # Right image -> (BCp*Hp, Wrp) bf16, zero padded (padded rows/cols contribute
    # zero, exactly matching padding_mode='zeros').  Resident across the grid.
    right = images_right.astype(jnp.float32).reshape(BC, H, Wr)
    right = jnp.pad(right, ((0, BCp - BC), (0, Hp - H), (0, Wrp - Wr)))
    right2d = right.reshape(BCp * Hp, Wrp).astype(jnp.bfloat16)

    # Destination canvas (left image + zeros), lane-dense (BCp, Nop) f32.
    dst_img = jnp.concatenate([images_left, jnp.zeros_like(images_right)], axis=-1)
    dst_mask = jnp.concatenate([mask_left, jnp.zeros_like(images_right)], axis=-1)

    def flat(x):
        y = x.astype(jnp.float32).reshape(BC, No)
        return jnp.pad(y, ((0, BCp - BC), (0, Nop - No)))

    dstimg_f = flat(dst_img)
    dstmask_f = flat(dst_mask)

    hinv = jnp.linalg.inv(homo.astype(jnp.float32)).reshape(-1)   # (9,)

    out_f, mask_f = pl.pallas_call(
        _make_stitch_kernel(H, Hp, Wr, Wrp, Wo, no_tile),
        out_shape=(jax.ShapeDtypeStruct((BCp, Nop), jnp.float32),
                   jax.ShapeDtypeStruct((BCp, Nop), jnp.float32)),
        grid=(num_tiles,),
        in_specs=[
            # H^{-1} scalars in SMEM (whole array every step).
            pl.BlockSpec((9,), lambda j: (0,),
                         memory_space=pltpu.MemorySpace.SMEM),
            # Right image: VMEM-resident across the whole grid.
            pl.BlockSpec((BCp * Hp, Wrp), lambda j: (0, 0)),
            # Canvas / mask tiles, lane-dense, double-buffered by Pallas.
            pl.BlockSpec((BCp, no_tile), lambda j: (0, j)),
            pl.BlockSpec((BCp, no_tile), lambda j: (0, j)),
        ],
        out_specs=(pl.BlockSpec((BCp, no_tile), lambda j: (0, j)),
                   pl.BlockSpec((BCp, no_tile), lambda j: (0, j))),
        compiler_params=pltpu.CompilerParams(
            dimension_semantics=("parallel",),       # shards tiles on v7x's 2 TCs
            vmem_limit_bytes=32 * 1024 * 1024,       # safe on v5e/v6e/v7x
        ),
    )(hinv, right2d, dstimg_f, dstmask_f)

    out = out_f[:BC, :No].reshape(B, C, H, Wo)
    mask = mask_f[:BC, :No].reshape(B, C, H, Wo)
    return out, mask


# ----------------------------------------------------------------------------
# Kernel 3: postprocess column-validity reduction
# ----------------------------------------------------------------------------
def _col_any_kernel(mask_ref, col_ref):
    s = jnp.sum(mask_ref[...], axis=0, keepdims=True)   # reduce over B*C*H
    col_ref[...] = (s > 0.0).astype(jnp.int32)


def postprocess(image, mask):
    B, C, H, Wo = mask.shape
    rows = B * C * H
    rows_p = _round_up(rows, 8)
    wo_p = _round_up(Wo, 128)
    m2 = mask.astype(jnp.float32).reshape(rows, Wo)
    m2 = jnp.pad(m2, ((0, rows_p - rows), (0, wo_p - Wo)))
    col = pl.pallas_call(
        _col_any_kernel,
        out_shape=jax.ShapeDtypeStruct((1, wo_p), jnp.int32),
        in_specs=[pl.BlockSpec(memory_space=pltpu.MemorySpace.VMEM)],
        out_specs=pl.BlockSpec(memory_space=pltpu.MemorySpace.VMEM),
    )(m2)
    # One host sync at the very end of forward (the reference does .item() too);
    # the crop itself is inherently a data-dependent output shape.
    index = int(jnp.argmin(col[0, :Wo]))   # first fully-invalid column (0 if none)
    if index == 0:
        return image
    return image[..., :index]


# ----------------------------------------------------------------------------
# Module-level forward
# ----------------------------------------------------------------------------
class ImageStitcherPallas:
    """Pallas TPU equivalent of kornia.contrib.ImageStitcher.forward."""

    def __init__(self, homographies, estimator="ransac", blending_method="naive"):
        if estimator not in ("ransac", "vanilla"):
            raise NotImplementedError(f"Unsupported estimator {estimator}.")
        if blending_method != "naive":
            raise NotImplementedError(f"Unsupported blending {blending_method}.")
        # Deterministic per-pair homographies standing in for matcher+RANSAC.
        self.homographies = homographies
        self.estimator = estimator
        self.blending_method = blending_method

    def preprocess(self, image_1, image_2):
        # Grayscale inputs that would feed the LoFTR matcher.
        return {"image0": rgb_to_grayscale(image_1),
                "image1": rgb_to_grayscale(image_2)}

    def forward(self, *imgs):
        img_out = imgs[0]
        mask_left = jnp.ones_like(img_out)
        for i in range(len(imgs) - 1):
            # TODO(synk): LoFTR matching + RANSAC homography estimation are not
            # translatable to Pallas; the grayscale preprocess only feeds that
            # stub, so its (dead) kernel launches are skipped here and the
            # homography comes from self.homographies.
            homo = self.homographies[i]
            img_out, mask_left = stitch_pair(img_out, imgs[i + 1], homo,
                                             mask_left=mask_left, mask_right=None)
        return postprocess(img_out, mask_left)

    __call__ = forward


if __name__ == "__main__":
    key = jax.random.PRNGKey(0)
    k1, k2 = jax.random.split(key)
    # Small RGB images, NCHW, B=1, C=3, H=W=16.
    img_left = jax.random.uniform(k1, (1, 3, 16, 16), dtype=jnp.float32)
    img_right = jax.random.uniform(k2, (1, 3, 16, 16), dtype=jnp.float32)

    # Deterministic homography: mostly a translation (overlap of ~4 px) with a
    # touch of shear/perspective, mapping the right image into the canvas.
    homo = jnp.array([[1.0,    0.02,  12.0],
                      [0.01,   1.0,    0.5],
                      [0.0005, 0.0002, 1.0]], dtype=jnp.float32)

    stitcher = ImageStitcherPallas(homographies=[homo])

    # Exercise the (matcher-feeding) grayscale kernel once for coverage.
    gray = jax.block_until_ready(rgb_to_grayscale(img_left))
    assert gray.shape == (1, 1, 16, 16)

    out = stitcher(img_left, img_right)
    out = jax.block_until_ready(out)

    assert out.ndim == 4 and out.shape[:3] == (1, 3, 16)
    assert bool(jnp.all(jnp.isfinite(out)))
    print("KERNEL_OK")
</pallas_src>

<mosaic_0001>
module attributes {stable_mosaic.version = 11 : i64} {
  func.func @_rgb_to_grayscale_kernel(%arg0: memref<3x256xf32, #tpu.memory_space<vmem>>, %arg1: memref<1x256xf32, #tpu.memory_space<vmem>>) attributes {dimension_semantics = [], scalar_prefetch = 0 : i64, scratch_operands = 0 : i64, tpu.core_type = #tpu.core_type<tc>} {
    %c0 = arith.constant 0 : index
    %c0_0 = arith.constant 0 : index
    %0 = vector.load %arg0[%c0, %c0_0] : memref<3x256xf32, #tpu.memory_space<vmem>>, vector<3x256xf32>
    %1 = vector.extract_strided_slice %0 {offsets = [0, 0], sizes = [1, 256], strides = [1, 1]} : vector<3x256xf32> to vector<1x256xf32>
    %cst = arith.constant 2.990000e-01 : f32
    %2 = vector.broadcast %cst : f32 to vector<1x256xf32>
    %3 = arith.mulf %2, %1 : vector<1x256xf32>
    %4 = vector.extract_strided_slice %0 {offsets = [1, 0], sizes = [1, 256], strides = [1, 1]} : vector<3x256xf32> to vector<1x256xf32>
    %cst_1 = arith.constant 5.870000e-01 : f32
    %5 = vector.broadcast %cst_1 : f32 to vector<1x256xf32>
    %6 = arith.mulf %5, %4 : vector<1x256xf32>
    %7 = arith.addf %3, %6 : vector<1x256xf32>
    %8 = vector.extract_strided_slice %0 {offsets = [2, 0], sizes = [1, 256], strides = [1, 1]} : vector<3x256xf32> to vector<1x256xf32>
    %cst_2 = arith.constant 1.140000e-01 : f32
    %9 = vector.broadcast %cst_2 : f32 to vector<1x256xf32>
    %10 = arith.mulf %9, %8 : vector<1x256xf32>
    %11 = arith.addf %7, %10 : vector<1x256xf32>
    %c0_3 = arith.constant 0 : index
    %c0_4 = arith.constant 0 : index
    %12 = vector.load %arg1[%c0_3, %c0_4] : memref<1x256xf32, #tpu.memory_space<vmem>>, vector<1x256xf32>
    tpu.vector_store %arg1[%c0_3, %c0_4], %11 {strides = array<i32>} : memref<1x256xf32, #tpu.memory_space<vmem>>, vector<1x256xf32>,
    return
  }
}

</mosaic_0001>

<llo_original>
// kernel: tpu_custom_call.1
$region0: #{tpu_custom_call.1}
  #allocation0 [shape = 'u32[]', space=smem, size = 0x4, offset = 0x4, fixed_abs, tag = 'smem constant byte address 0x4 - core index']
  #allocation1 [shape = 'u32[72,128]{1,0:T(1,128)}', space=vmem, size = 0x9000, scoped, tag = 'internal scratch']
  %s0 = inlined_call_operand.hbm [shape: f32[3,256], index: 0, kind: input, shape index: {}]
  %s1 = inlined_call_operand.hbm [shape: f32[1,256], index: 1, kind: output, shape index: {}]
  %s2 = sld [smem:[#allocation0]]
  $region18: #{tpu_custom_call.1} parent=0
    _
  %s4 = ssub.s32 1, %s2
  %s5 = scalar_select 0, %s4, %s2
  $region1: #{tpu_custom_call.1} parent=0
    #allocation2 [shape = 'u8[4096]{0}', space=vmem, size = 0x1000, scoped, tag = 'input window, operand 0, single buffered']
    #allocation3 [shape = 's32[1]{0}', space=sflag, size = 0x4, scoped, tag = 'scoped memory for tpu_custom_call.1']
    #allocation4 [shape = 's32[1]{0}', space=sflag, size = 0x4, scoped, tag = 'scoped memory for tpu_custom_call.1']
    #allocation5 [shape = 'u8[1024]{0}', space=vmem, size = 0x400, scoped, tag = 'output window, operand 0, single buffered']
    %6 = vsyncpa [#allocation3], 0
    %7 = vsyncpa [#allocation4], 0
    // Predicated region
    $region2: #{tpu_custom_call.1} parent=1 // pred_check
      _
    $region3: #{tpu_custom_call.1} parent=1 // pred_check_branch
      %9 = sbr.rel (0) target = $region5
    $region4: #{tpu_custom_call.1} parent=1 // pred_region
      %11 = vsyncadd [#allocation3], 0
      %s13 = sshll.u32 %s0, 4
      %s14 = int_to_ptr.hbm [resolvable:$true] %s13
      %s15 = sshll.u32 [#allocation2], 4
      %s16 = int_to_ptr.vmem [resolvable:$true] %s15
      %18 = dma.hbm_to_vmem [thread:$0]  %s14, 128, %s16, [#allocation3]
    $region5: #{tpu_custom_call.1} parent=1 // pred_fallthru
      _
    // Predicated region
    $region6: #{tpu_custom_call.1} parent=1 // pred_check
      _
    $region7: #{tpu_custom_call.1} parent=1 // pred_check_branch
      %20 = sbr.rel (0) target = $region9
    $region8: #{tpu_custom_call.1} parent=1 // pred_region
      %22 = dma.done [#allocation3], 128
    $region9: #{tpu_custom_call.1} parent=1 // pred_fallthru
      _
    %v23 = vld [vmem:[#allocation2] sm:$0x77]
    %v24 = vmul.f32 %v23, 0.299
    %v25 = vmul.f32 %v23, 0.587
    %v27 = vrot.slane %v25, 5
    %v28 = vrot.slane %v27, 4
    %v30 = vadd.f32 %v24, %v28
    %v31 = vmul.f32 %v23, 0.114
    %v33 = vrot.slane %v31, 6
    %v34 = vrot.slane %v33, 4
    %v36 = vadd.f32 %v30, %v34
    %v38 = vrot.slane %v36, 3
    %vm39 = vcmask 1040384
    %v40 = vsel %vm39, %v36, %v38
    %v42 = vlaneseq
    %vm43 = vcmp.ge.s32.totalorder %v42, 0
    %vm44 = vcmp.lt.s32.totalorder %v42, 256
    %vm45 = vmand %vm43, %vm44
    %46 = vst.msk [vmem:[#allocation5] sm:$0x3] %vm45, %v40
    // Predicated region
    $region10: #{tpu_custom_call.1} parent=1 // pred_check
      _
    $region11: #{tpu_custom_call.1} parent=1 // pred_check_branch
      %48 = sbr.rel (0) target = $region13
    $region12: #{tpu_custom_call.1} parent=1 // pred_region
      %50 = vsyncadd [#allocation4], 0
      %s52 = sshll.u32 [#allocation5], 4
      %s53 = int_to_ptr.vmem [resolvable:$true] %s52
      %s54 = sshll.u32 %s1, 4
      %s55 = int_to_ptr.hbm [resolvable:$true] %s54
      %57 = dma.vmem_to_hbm [thread:$0]  %s53, 32, %s55, [#allocation4]
    $region13: #{tpu_custom_call.1} parent=1 // pred_fallthru
      _
    // Predicated region
    $region14: #{tpu_custom_call.1} parent=1 // pred_check
      _
    $region15: #{tpu_custom_call.1} parent=1 // pred_check_branch
      %59 = sbr.rel (0) target = $region17
    $region16: #{tpu_custom_call.1} parent=1 // pred_region
      %61 = dma.done [#allocation4], 32
    $region17: #{tpu_custom_call.1} parent=1 // pred_fallthru
      _
    %62 = vsyncpa [#allocation3], 1
    %63 = vsyncpa [#allocation4], 1

</llo_original>
